<compile_context>
chip_gen: v7x
topology: tpu7x:2x2x1
jax: 0.10.0
libtpu: 0.0.40
codegen_flags: <defaults>
</compile_context>

<pallas_src>
import numpy as np
import jax
import jax.numpy as jnp
from jax.experimental import pallas as pl
from jax.experimental.pallas import tpu as pltpu

LANE = 128
SUBLANE = 8


def _cdiv(a, b):
    return (a + b - 1) // b


def _round_up(a, b):
    return _cdiv(a, b) * b


# ----------------------------------------------------------------------------
# Kernel
# ----------------------------------------------------------------------------
def atom_embed_kernel(off_ref, idx_ref, w_ref, o_ref):
    """off_ref: (J,) int32 per-name vocab offsets (SMEM, scalar-prefetched).
    idx_ref: (tm, J) int32 raw per-name feature indices.
    w_ref:   (V_pad, E_pad) f32 concatenated + zero-padded embedding tables.
    o_ref:   (tm, E_pad) f32 summed embeddings (lane-dense)."""
    tm, J = idx_ref.shape
    V_pad = w_ref.shape[0]

    # Lane ids 0..V_pad-1, kept at (1, V_pad): broadcasting handles the rows.
    lane_ids = jax.lax.broadcasted_iota(jnp.int32, (1, V_pad), 1)

    # Multi-hot over the concatenated vocab.  Each name's indices land in a
    # disjoint offset range, so the J one-hot masks never collide -> boolean OR
    # is exactly the sum, and we convert to f32 exactly once at the end.
    hit = None
    for j in range(J):                       # J is small & static -> unrolled
        idx_g = idx_ref[:, j:j + 1] + off_ref[j]     # (tm, 1) global index
        m = lane_ids == idx_g                        # (tm, V_pad) bool
        hit = m if hit is None else jnp.logical_or(hit, m)
    mh = hit.astype(jnp.float32)

    # Single MXU contraction = gather + cross-name sum in one shot.
    o_ref[...] = jnp.dot(mh, w_ref[...], preferred_element_type=jnp.float32)


# ----------------------------------------------------------------------------
# One-time parameter prep (hoisted out of the forward path)
# ----------------------------------------------------------------------------
def prep_atom_embedding_params(tables, embed_dim):
    """tables: list of (vocab_i, embed_dim) f32 embedding weights.

    Returns (W_pad, offsets, embed_dim):
      W_pad:   (V_pad, E_pad) f32 concatenated tables, zero-padded to 128-lane
               multiples on both axes.
      offsets: (J,) int32 start row of each table inside the concatenation.
    """
    vocabs = [int(t.shape[0]) for t in tables]
    offsets = np.zeros((len(vocabs),), np.int32)
    offsets[1:] = np.cumsum(vocabs[:-1])
    V_total = int(sum(vocabs))

    V_pad = _round_up(V_total, LANE)                    # multiple of 128 lanes
    E_pad = max(LANE, _round_up(embed_dim, LANE))

    W_pad = jnp.zeros((V_pad, E_pad), jnp.float32)
    W_pad = W_pad.at[:V_total, :embed_dim].set(
        jnp.concatenate([t.astype(jnp.float32) for t in tables], axis=0))
    return W_pad, jnp.asarray(offsets, jnp.int32), embed_dim


# ----------------------------------------------------------------------------
# Forward wrapper
# ----------------------------------------------------------------------------
def atom_embedding(node_features, atom_names, W_pad, offsets, embed_dim,
                   *, tm=512, return_padded=False):
    """node_features: dict name -> (N,) int array of feature indices.

    Returns (N, embed_dim) f32 summed embeddings, or the padded
    (N_pad, E_pad) lane-dense slab if return_padded=True (padding rows are
    exactly zero)."""
    idx = jnp.stack(
        [node_features[name].astype(jnp.int32) for name in atom_names], axis=1
    )                                                   # (N, J) raw indices
    N, J = idx.shape
    V_pad, E_pad = W_pad.shape

    # Clamp the row tile so we get >= 2 grid tiles whenever N > 8 (lets v7x's
    # two TensorCores split the "parallel" axis) and never over-pad small N.
    tm_eff = min(tm, max(SUBLANE, _round_up(_cdiv(N, 2), SUBLANE)))
    n_tiles = _cdiv(N, tm_eff)
    N_pad = n_tiles * tm_eff
    if N_pad != N:
        # Pad with V_pad: past every table even after the in-kernel offset add,
        # so padded rows match no lane and produce exactly-zero outputs.
        idx = jnp.pad(idx, ((0, N_pad - N), (0, 0)), constant_values=V_pad)

    out = pl.pallas_call(
        atom_embed_kernel,
        out_shape=jax.ShapeDtypeStruct((N_pad, E_pad), jnp.float32),
        grid_spec=pltpu.PrefetchScalarGridSpec(
            num_scalar_prefetch=1,                      # offsets -> SMEM
            grid=(n_tiles,),
            in_specs=[
                pl.BlockSpec((tm_eff, J), lambda i, off: (i, 0)),    # idx tile
                pl.BlockSpec((V_pad, E_pad), lambda i, off: (0, 0)),  # tables
            ],
            out_specs=pl.BlockSpec((tm_eff, E_pad), lambda i, off: (i, 0)),
        ),
        compiler_params=pltpu.CompilerParams(
            dimension_semantics=("parallel",)),
    )(offsets, idx, W_pad)

    if return_padded:
        return out
    return out[:N, :embed_dim]


# ----------------------------------------------------------------------------
# Pure-JAX reference (mirrors the PyTorch forward)
# ----------------------------------------------------------------------------
def _reference(node_features, atom_names, tables):
    out = 0.0
    for name, tbl in zip(atom_names, tables):
        out = out + tbl[node_features[name]]
    return out


if __name__ == "__main__":
    key = jax.random.PRNGKey(0)

    # Small, module-consistent shapes.  Feature sizes mimic CompoundKit
    # (embedding rows = feature_size + 1, as in the PyTorch __init__).
    atom_feature_sizes = {
        "atomic_num": 119,
        "chiral_tag": 4,
        "degree": 11,
        "is_aromatic": 2,
    }
    atom_names = ["atomic_num", "chiral_tag", "degree", "is_aromatic"]
    embed_dim = 32
    N = 50  # number of atoms (deliberately not a multiple of the row tile)

    # Embedding tables.
    tables = []
    for name in atom_names:
        key, k = jax.random.split(key)
        vocab = atom_feature_sizes[name] + 1
        tables.append(jax.random.normal(k, (vocab, embed_dim), jnp.float32) * 0.1)

    # Node features (integer indices per atom name).
    node_features = {}
    for name in atom_names:
        key, k = jax.random.split(key)
        node_features[name] = jax.random.randint(
            k, (N,), 0, atom_feature_sizes[name] + 1, dtype=jnp.int32)

    # One-time param prep, then forward.
    W_pad, offsets, E = prep_atom_embedding_params(tables, embed_dim)
    out = atom_embedding(node_features, atom_names, W_pad, offsets, E, tm=512)
    out = jax.block_until_ready(out)

    ref = _reference(node_features, atom_names, tables)
    if not np.allclose(np.asarray(out), np.asarray(ref), rtol=1e-5, atol=1e-5):
        raise AssertionError("Pallas AtomEmbedding output mismatch vs reference")

    print("KERNEL_OK")
</pallas_src>

<mosaic_0001>
module attributes {stable_mosaic.version = 11 : i64} {
  func.func @atom_embed_kernel(%arg0: i32, %arg1: memref<4xi32, #tpu.memory_space<smem>>, %arg2: memref<32x4xi32, #tpu.memory_space<vmem>>, %arg3: memref<256x128xf32, #tpu.memory_space<vmem>>, %arg4: memref<32x128xf32, #tpu.memory_space<vmem>>) attributes {dimension_semantics = [#tpu.dimension_semantics<parallel>], iteration_bounds = array<i64: 2>, scalar_prefetch = 1 : i64, scratch_operands = 0 : i64, tpu.core_type = #tpu.core_type<tc>, window_params = [{transform_indices = @transform_0, window_bounds = array<i64: 32, 4>}, {pipeline_mode = #tpu.pipeline_mode<synchronous>, transform_indices = @transform_1, window_bounds = array<i64: 256, 128>}, {transform_indices = @transform_2, window_bounds = array<i64: 32, 128>}]} {
    %0 = tpu.iota {dimensions = array<i32: 1>} : vector<1x256xi32>
    %c0 = arith.constant 0 : index
    %c0_0 = arith.constant 0 : index
    %1 = vector.load %arg2[%c0, %c0_0] : memref<32x4xi32, #tpu.memory_space<vmem>>, vector<32x1xi32>
    %c0_1 = arith.constant 0 : index
    %2 = memref.load %arg1[%c0_1] : memref<4xi32, #tpu.memory_space<smem>>
    %3 = vector.broadcast %2 : i32 to vector<32x1xi32>
    %4 = arith.addi %1, %3 : vector<32x1xi32>
    %5 = vector.broadcast %0 : vector<1x256xi32> to vector<32x256xi32>
    %6 = vector.broadcast %4 : vector<32x1xi32> to vector<32x256xi32>
    %7 = arith.cmpi eq, %5, %6 : vector<32x256xi32>
    %c0_2 = arith.constant 0 : index
    %c1 = arith.constant 1 : index
    %8 = vector.load %arg2[%c0_2, %c1] : memref<32x4xi32, #tpu.memory_space<vmem>>, vector<32x1xi32>
    %c1_3 = arith.constant 1 : index
    %9 = memref.load %arg1[%c1_3] : memref<4xi32, #tpu.memory_space<smem>>
    %10 = vector.broadcast %9 : i32 to vector<32x1xi32>
    %11 = arith.addi %8, %10 : vector<32x1xi32>
    %12 = vector.broadcast %0 : vector<1x256xi32> to vector<32x256xi32>
    %13 = vector.broadcast %11 : vector<32x1xi32> to vector<32x256xi32>
    %14 = arith.cmpi eq, %12, %13 : vector<32x256xi32>
    %15 = arith.ori %7, %14 : vector<32x256xi1>
    %c0_4 = arith.constant 0 : index
    %c2 = arith.constant 2 : index
    %16 = vector.load %arg2[%c0_4, %c2] : memref<32x4xi32, #tpu.memory_space<vmem>>, vector<32x1xi32>
    %c2_5 = arith.constant 2 : index
    %17 = memref.load %arg1[%c2_5] : memref<4xi32, #tpu.memory_space<smem>>
    %18 = vector.broadcast %17 : i32 to vector<32x1xi32>
    %19 = arith.addi %16, %18 : vector<32x1xi32>
    %20 = vector.broadcast %0 : vector<1x256xi32> to vector<32x256xi32>
    %21 = vector.broadcast %19 : vector<32x1xi32> to vector<32x256xi32>
    %22 = arith.cmpi eq, %20, %21 : vector<32x256xi32>
    %23 = arith.ori %15, %22 : vector<32x256xi1>
    %c0_6 = arith.constant 0 : index
    %c3 = arith.constant 3 : index
    %24 = vector.load %arg2[%c0_6, %c3] : memref<32x4xi32, #tpu.memory_space<vmem>>, vector<32x1xi32>
    %c3_7 = arith.constant 3 : index
    %25 = memref.load %arg1[%c3_7] : memref<4xi32, #tpu.memory_space<smem>>
    %26 = vector.broadcast %25 : i32 to vector<32x1xi32>
    %27 = arith.addi %24, %26 : vector<32x1xi32>
    %28 = vector.broadcast %0 : vector<1x256xi32> to vector<32x256xi32>
    %29 = vector.broadcast %27 : vector<32x1xi32> to vector<32x256xi32>
    %30 = arith.cmpi eq, %28, %29 : vector<32x256xi32>
    %31 = arith.ori %23, %30 : vector<32x256xi1>
    %32 = arith.extui %31 : vector<32x256xi1> to vector<32x256xi32>
    %33 = arith.sitofp %32 : vector<32x256xi32> to vector<32x256xf32>
    %c0_8 = arith.constant 0 : index
    %c0_9 = arith.constant 0 : index
    %34 = vector.load %arg3[%c0_8, %c0_9] : memref<256x128xf32, #tpu.memory_space<vmem>>, vector<256x128xf32>
    %cst = arith.constant dense<0.000000e+00> : vector<32x128xf32>
    %35 = tpu.matmul %33, %34, %cst {dimension_numbers = #tpu.dot_dimension_numbers<[1], [0], [0], [1], [0, 0, 1, 1], [], []>} : vector<32x256xf32>, vector<256x128xf32>, vector<32x128xf32> -> vector<32x128xf32>
    %c0_10 = arith.constant 0 : index
    %c0_11 = arith.constant 0 : index
    %36 = vector.load %arg4[%c0_10, %c0_11] : memref<32x128xf32, #tpu.memory_space<vmem>>, vector<32x128xf32>
    tpu.vector_store %arg4[%c0_10, %c0_11], %35 {strides = array<i32>} : memref<32x128xf32, #tpu.memory_space<vmem>>, vector<32x128xf32>,
    return
  }
  func.func @transform_0(%arg0: i32, %arg1: memref<4xi32, #tpu.memory_space<smem>>) -> (i32, i32) {
    %c0_i32 = arith.constant 0 : i32
    %c0_i32_0 = arith.constant 0 : i32
    return %arg0, %c0_i32 : i32, i32
  }
  func.func @transform_1(%arg0: i32, %arg1: memref<4xi32, #tpu.memory_space<smem>>) -> (i32, i32) {
    %c0_i32 = arith.constant 0 : i32
    %c0_i32_0 = arith.constant 0 : i32
    %c0_i32_1 = arith.constant 0 : i32
    return %c0_i32, %c0_i32_0 : i32, i32
  }
  func.func @transform_2(%arg0: i32, %arg1: memref<4xi32, #tpu.memory_space<smem>>) -> (i32, i32) {
    %c0_i32 = arith.constant 0 : i32
    %c0_i32_0 = arith.constant 0 : i32
    return %arg0, %c0_i32 : i32, i32
  }
}

</mosaic_0001>

<llo_original>
// kernel: tpu_custom_call.1
$region0: #{tpu_custom_call.1}
  #allocation0 [shape = 'u32[]', space=smem, size = 0x4, offset = 0x4, fixed_abs, tag = 'smem constant byte address 0x4 - core index']
  #allocation1 [shape = 'u32[144,128]{1,0:T(1,128)}', space=vmem, size = 0x12000, scoped, tag = 'internal scratch']
  #allocation2 [shape = 's32[1]{0}', space=sflag, size = 0x4, scoped, tag = 'scoped memory for tpu_custom_call.1']
  #allocation3 [shape = 'u8[512]{0}', space=smem, size = 0x200, scoped, tag = 'prefetched SMEM operand 0']
  %s0 = inlined_call_operand.vmem [shape: s32[4], index: 0, kind: input, shape index: {}]
  %s1 = inlined_call_operand.vmem [shape: s32[64,4], index: 1, kind: input, shape index: {}]
  %s2 = inlined_call_operand.hbm [shape: f32[256,128], index: 2, kind: input, shape index: {}]
  %s3 = inlined_call_operand.hbm [shape: f32[64,128], index: 3, kind: output, shape index: {}]
  %s4 = sld [smem:[#allocation0]]
  $region45: #{tpu_custom_call.1} parent=0
    _
  %s6 = ssub.s32 1, %s4
  %s7 = scalar_select 0, %s6, %s4
  %s8 = sshll.u32 %s0, 4
  %s9 = int_to_ptr.vmem [resolvable:$true] %s8
  %11 = dma.vmem_to_smem %s9, 16, [#allocation3], [#allocation2]
  %12 = dma.done [#allocation2], 16
  %13 = sfence
  $region1: #{tpu_custom_call.1} parent=0
    #allocation4 [shape = 'u8[131072]{0}', space=vmem, size = 0x20000, scoped, tag = 'input window, operand 2, single buffered']
    #allocation5 [shape = 's32[2]{0}', space=sflag, size = 0x8, scoped, tag = 'scoped memory for tpu_custom_call.1']
    #allocation6 [shape = 's32[2]{0}', space=sflag, size = 0x8, scoped, tag = 'scoped memory for tpu_custom_call.1']
    #allocation7 [shape = 'u8[32768]{0}', space=vmem, size = 0x8000, scoped, tag = 'output window, operand 0']
    %14 = vsyncpa [#allocation5], 0
    %15 = vsyncpa [#allocation6], 0
    %s16 = scalar_lea.sflag [#allocation6], 1
    %17 = vsyncpa %s16, 0
    loop: start=0, step=1, limit=4
    $region2: #{tpu_custom_call.1} parent=1 // loop_pre_header
      _
    $region3: #{tpu_custom_call.1} parent=1 // loop_header
      %s19 = sphi 0, %s23
      %p20 = scmp.ge.s32.totalorder %s19, 4
      %s29 = sphi 0, %s31
      %s32 = sphi 0, %s29
      %s33 = sphi 0, %s32
      %s49 = sphi 0, %s33
      %s53 = sphi 0, %s53
      %s55 = sphi 0, %s53
      %s56 = sphi 0, %s55
      %s70 = sphi 0, %s56
      %s76 = sphi 0, %s78
      %s79 = sphi 0, %s76
      %s80 = sphi 0, %s79
      %s96 = sphi 0, %s80
    $region4: #{tpu_custom_call.1} parent=1 // loop_header_branch
      %22 = sbr.rel (%p20) target = $region8
    $region5: #{tpu_custom_call.1} parent=1 // loop_body
      %s24 = ssub.s32 %s19, 1
      %s25 = ssub.s32 %s19, 2
      %s26 = sadd.s32 %s19, 1
      %s27 = ssub.s32 %s19, %s26
      %p28 = scmp.eq.s32.totalorder %s27, 0
      %s30 = sadd.s32 %s29, 1
      %s31 = scalar_select %p28, %s29, %s30
      %p34 = pneg %p28
      %p35 = scmp.eq.s32.totalorder %s19, 1
      %p36 = por %p34, %p35
      %p37 = scmp.ne.s32.totalorder %s29, %s32
      %p38 = scmp.eq.s32.totalorder %s19, 0
      %p39 = por %p37, %p38
      %p40 = scmp.ne.s32.totalorder %s29, %s32
      %p41 = scmp.eq.s32.totalorder %s24, 1
      %p42 = por %p40, %p41
      %p43 = scmp.ne.s32.totalorder %s32, %s33
      %p44 = scmp.eq.s32.totalorder %s24, 0
      %p45 = por %p43, %p44
      %p46 = scmp.ne.s32.totalorder %s32, %s33
      %p47 = scmp.eq.s32.totalorder %s25, 1
      %p48 = por %p46, %p47
      %p50 = scmp.ne.s32.totalorder %s33, %s49
      %p51 = scmp.eq.s32.totalorder %s25, 0
      %p52 = por %p50, %p51
      %s54 = sadd.s32 %s53, 1
      %p57 = scmp.eq.s32.totalorder %s19, 1
      %p58 = scmp.ne.s32.totalorder %s53, %s55
      %p59 = scmp.eq.s32.totalorder %s19, 0
      %p60 = por %p58, %p59
      %p61 = scmp.ne.s32.totalorder %s53, %s55
      %p62 = scmp.eq.s32.totalorder %s24, 1
      %p63 = por %p61, %p62
      %p64 = scmp.ne.s32.totalorder %s55, %s56
      %p65 = scmp.eq.s32.totalorder %s24, 0
      %p66 = por %p64, %p65
      %p67 = scmp.ne.s32.totalorder %s55, %s56
      %p68 = scmp.eq.s32.totalorder %s25, 1
      %p69 = por %p67, %p68
      %p71 = scmp.ne.s32.totalorder %s56, %s70
      %p72 = scmp.eq.s32.totalorder %s25, 0
      %p73 = por %p71, %p72
      %s74 = ssub.s32 %s19, %s26
      %p75 = scmp.eq.s32.totalorder %s74, 0
      %s77 = sadd.s32 %s76, 1
      %s78 = scalar_select %p75, %s76, %s77
      %p81 = pneg %p75
      %p82 = scmp.eq.s32.totalorder %s19, 1
      %p83 = por %p81, %p82
      %p84 = scmp.ne.s32.totalorder %s76, %s79
      %p85 = scmp.eq.s32.totalorder %s19, 0
      %p86 = por %p84, %p85
      %p87 = scmp.ne.s32.totalorder %s76, %s79
      %p88 = scmp.eq.s32.totalorder %s24, 1
      %p89 = por %p87, %p88
      %p90 = scmp.ne.s32.totalorder %s79, %s80
      %p91 = scmp.eq.s32.totalorder %s24, 0
      %p92 = por %p90, %p91
      %p93 = scmp.ne.s32.totalorder %s79, %s80
      %p94 = scmp.eq.s32.totalorder %s25, 1
      %p95 = por %p93, %p94
      %p97 = scmp.ne.s32.totalorder %s80, %s96
      %p98 = scmp.eq.s32.totalorder %s25, 0
      %p99 = por %p97, %p98
      %p100 = scmp.le.s32.totalorder 1, %s19
      %p101 = scmp.lt.s32.totalorder %s19, 3
      %p102 = pnand %p100, %p101
      %p103 = pneg %p102
      // Predicated region
      $region9: #{tpu_custom_call.1} parent=5 // pred_check
        _
      $region10: #{tpu_custom_call.1} parent=5 // pred_check_branch
        %105 = sbr.rel (%p102) target = $region12
      $region11: #{tpu_custom_call.1} parent=5 // pred_region
        %s106 = ssub.s32 %s19, 1
        // Predicated region
        $region13: #{tpu_custom_call.1} parent=11 // pred_check
          %p107 = pneg %p66
        $region14: #{tpu_custom_call.1} parent=11 // pred_check_branch
          %109 = sbr.rel (%p107) target = $region16
        $region15: #{tpu_custom_call.1} parent=11 // pred_region
          %s111 = ssub.s32 4096, 4096
          %112 = vsyncadd [#allocation5], %s111
          %s113 = sshll.u32 [#allocation4], 4
          %s114 = int_to_ptr.vmem [resolvable:$true] %s113
          %119 = dma.hbm_to_vmem [thread:$0]  %s2, 4096, %s114, [#allocation5], 128, 128, 8
        $region16: #{tpu_custom_call.1} parent=11 // pred_fallthru
          _
      $region12: #{tpu_custom_call.1} parent=5 // pred_fallthru
        _
      %p120 = scmp.lt.s32.totalorder %s19, 2
      // Predicated region
      $region17: #{tpu_custom_call.1} parent=5 // pred_check
        %p121 = pneg %p120
      $region18: #{tpu_custom_call.1} parent=5 // pred_check_branch
        %123 = sbr.rel (%p121) target = $region20
      $region19: #{tpu_custom_call.1} parent=5 // pred_region
        // Predicated region
        $region21: #{tpu_custom_call.1} parent=19 // pred_check
          %p124 = pneg %p39
        $region22: #{tpu_custom_call.1} parent=19 // pred_check_branch
          %126 = sbr.rel (%p124) target = $region24
        $region23: #{tpu_custom_call.1} parent=19 // pred_region
          %s127 = smul.u32 4, %s19
          %p128 = scmp.lt.s32.totalorder %s127, 7
          %s129 = scalar_select %p128, %s127, 7
          %s130 = smul.addr %s129, 8
          %s131 = scalar_lea.vmem %s1, %s130
          %s132 = smul.u32 4, %s19
        $region24: #{tpu_custom_call.1} parent=19 // pred_fallthru
          _
      $region20: #{tpu_custom_call.1} parent=5 // pred_fallthru
        _
      %p133 = scmp.le.s32.totalorder 1, %s19
      %p134 = scmp.lt.s32.totalorder %s19, 3
      %p135 = pnand %p133, %p134
      %p136 = pneg %p135
      // Predicated region
      $region25: #{tpu_custom_call.1} parent=5 // pred_check
        _
      $region26: #{tpu_custom_call.1} parent=5 // pred_check_branch
        %138 = sbr.rel (%p135) target = $region28
      $region27: #{tpu_custom_call.1} parent=5 // pred_region
        %s139 = ssub.s32 %s19, 1
        // Predicated region
        $region29: #{tpu_custom_call.1} parent=27 // pred_check
          %p140 = pneg %p66
        $region30: #{tpu_custom_call.1} parent=27 // pred_check_branch
          %142 = sbr.rel (%p140) target = $region32
        $region31: #{tpu_custom_call.1} parent=27 // pred_region
          %143 = dma.done [#allocation5], 4096
        $region32: #{tpu_custom_call.1} parent=27 // pred_fallthru
          _
        %s144 = smul.u32 4, %s24
        %p145 = scmp.lt.s32.totalorder %s144, 7
        %s146 = scalar_select %p145, %s144, 7
        %s147 = smul.addr %s146, 8
        %s148 = scalar_lea.vmem %s1, %s147
        %p149 = pneg %p45
        %p150 = pneg %p42
        %p151 = pneg %p66
        %p152 = pneg %p63
        %p153 = pneg %p92
        %p154 = pneg %p89
        %s155 = sand.u32 %s79, 1
        %s156 = scalar_lea.sflag [#allocation6], %s155
        %s157 = sand.u32 %s79, 1
        %s158 = smul.addr %s157, 32
        %s159 = scalar_lea.vmem [#allocation7], %s158
        %s160 = smul.u32 4, %s24
        %p161 = scmp.lt.s32.totalorder %s160, 7
        %s162 = scalar_select %p161, %s160, 7
        %s163 = smul.addr %s162, 8
        %s164 = scalar_lea.vmem %s1, %s163
        %s165 = smul.u32 4, %s24
        %s166 = smul.u32 4, %s24
        %v167 = vlaneseq
        %v168 = vand.u32 %v167, 127
        %v169 = vadd.s32 %v168, 128
        %v170 = vld [vmem:[%s164] sm:$0xff]
        %v171 = vld [vmem:[%s164 + $0x8] sm:$0xff]
        %v172 = vld [vmem:[%s164 + $0x10] sm:$0xff]
        %v173 = vld [vmem:[%s164 + $0x18] sm:$0xff]
        %s174 = sld [smem:[#allocation3]]
        %v175 = vstv %s174
        %v176 = vadd.s32 %v170, %v175
        %v177 = vadd.s32 %v171, %v175
        %v178 = vadd.s32 %v172, %v175
        %v179 = vadd.s32 %v173, %v175
        %180 = vset.pattern.permute.xlu0 0
        %181 = vperm.xlu0 %180, %v176
        %v182 = vpop.permute.xlu0 %181
        %183 = vset.pattern.permute.xlu0 0
        %184 = vperm.xlu0 %183, %v177
        %v185 = vpop.permute.xlu0 %184
        %186 = vset.pattern.permute.xlu0 0
        %187 = vperm.xlu0 %186, %v178
        %v188 = vpop.permute.xlu0 %187
        %189 = vset.pattern.permute.xlu0 0
        %190 = vperm.xlu0 %189, %v179
        %v191 = vpop.permute.xlu0 %190
        %vm192 = vcmp.eq.s32.totalorder %v168, %v182
        %vm193 = vcmp.eq.s32.totalorder %v169, %v182
        %vm194 = vcmp.eq.s32.totalorder %v168, %v185
        %vm195 = vcmp.eq.s32.totalorder %v169, %v185
        %vm196 = vcmp.eq.s32.totalorder %v168, %v188
        %vm197 = vcmp.eq.s32.totalorder %v169, %v188
        %vm198 = vcmp.eq.s32.totalorder %v168, %v191
        %vm199 = vcmp.eq.s32.totalorder %v169, %v191
        %s200 = sld [smem:[#allocation3 + $0x1]]
        %v201 = vstv %s200
        %v202 = vadd.s32 %v170, %v201
        %v203 = vadd.s32 %v171, %v201
        %v204 = vadd.s32 %v172, %v201
        %v205 = vadd.s32 %v173, %v201
        %206 = vset.pattern.permute.xlu0 1
        %207 = vperm.xlu0 %206, %v202
        %v208 = vpop.permute.xlu0 %207
        %209 = vset.pattern.permute.xlu0 1
        %210 = vperm.xlu0 %209, %v203
        %v211 = vpop.permute.xlu0 %210
        %212 = vset.pattern.permute.xlu0 1
        %213 = vperm.xlu0 %212, %v204
        %v214 = vpop.permute.xlu0 %213
        %215 = vset.pattern.permute.xlu0 1
        %216 = vperm.xlu0 %215, %v205
        %v217 = vpop.permute.xlu0 %216
        %vm218 = vcmp.eq.s32.totalorder %v168, %v208
        %vm219 = vcmp.eq.s32.totalorder %v169, %v208
        %vm220 = vcmp.eq.s32.totalorder %v168, %v211
        %vm221 = vcmp.eq.s32.totalorder %v169, %v211
        %vm222 = vcmp.eq.s32.totalorder %v168, %v214
        %vm223 = vcmp.eq.s32.totalorder %v169, %v214
        %vm224 = vcmp.eq.s32.totalorder %v168, %v217
        %vm225 = vcmp.eq.s32.totalorder %v169, %v217
        %vm226 = vmor %vm192, %vm218
        %vm227 = vmor %vm193, %vm219
        %vm228 = vmor %vm194, %vm220
        %vm229 = vmor %vm195, %vm221
        %vm230 = vmor %vm196, %vm222
        %vm231 = vmor %vm197, %vm223
        %vm232 = vmor %vm198, %vm224
        %vm233 = vmor %vm199, %vm225
        %s234 = sld [smem:[#allocation3 + $0x2]]
        %v235 = vstv %s234
        %v236 = vadd.s32 %v170, %v235
        %v237 = vadd.s32 %v171, %v235
        %v238 = vadd.s32 %v172, %v235
        %v239 = vadd.s32 %v173, %v235
        %240 = vset.pattern.permute.xlu0 2
        %241 = vperm.xlu0 %240, %v236
        %v242 = vpop.permute.xlu0 %241
        %243 = vset.pattern.permute.xlu0 2
        %244 = vperm.xlu0 %243, %v237
        %v245 = vpop.permute.xlu0 %244
        %246 = vset.pattern.permute.xlu0 2
        %247 = vperm.xlu0 %246, %v238
        %v248 = vpop.permute.xlu0 %247
        %249 = vset.pattern.permute.xlu0 2
        %250 = vperm.xlu0 %249, %v239
        %v251 = vpop.permute.xlu0 %250
        %vm252 = vcmp.eq.s32.totalorder %v168, %v242
        %vm253 = vcmp.eq.s32.totalorder %v169, %v242
        %vm254 = vcmp.eq.s32.totalorder %v168, %v245
        %vm255 = vcmp.eq.s32.totalorder %v169, %v245
        %vm256 = vcmp.eq.s32.totalorder %v168, %v248
        %vm257 = vcmp.eq.s32.totalorder %v169, %v248
        %vm258 = vcmp.eq.s32.totalorder %v168, %v251
        %vm259 = vcmp.eq.s32.totalorder %v169, %v251
        %vm260 = vmor %vm226, %vm252
        %vm261 = vmor %vm227, %vm253
        %vm262 = vmor %vm228, %vm254
        %vm263 = vmor %vm229, %vm255
        %vm264 = vmor %vm230, %vm256
        %vm265 = vmor %vm231, %vm257
        %vm266 = vmor %vm232, %vm258
        %vm267 = vmor %vm233, %vm259
        %s268 = sld [smem:[#allocation3 + $0x3]]
        %v269 = vstv %s268
        %v270 = vadd.s32 %v170, %v269
        %v271 = vadd.s32 %v171, %v269
        %v272 = vadd.s32 %v172, %v269
        %v273 = vadd.s32 %v173, %v269
        %274 = vset.pattern.permute.xlu0 3
        %275 = vperm.xlu0 %274, %v270
        %v276 = vpop.permute.xlu0 %275
        %277 = vset.pattern.permute.xlu0 3
        %278 = vperm.xlu0 %277, %v271
        %v279 = vpop.permute.xlu0 %278
        %280 = vset.pattern.permute.xlu0 3
        %281 = vperm.xlu0 %280, %v272
        %v282 = vpop.permute.xlu0 %281
        %283 = vset.pattern.permute.xlu0 3
        %284 = vperm.xlu0 %283, %v273
        %v285 = vpop.permute.xlu0 %284
        %vm286 = vcmp.eq.s32.totalorder %v168, %v276
        %vm287 = vcmp.eq.s32.totalorder %v169, %v276
        %vm288 = vcmp.eq.s32.totalorder %v168, %v279
        %vm289 = vcmp.eq.s32.totalorder %v169, %v279
        %vm290 = vcmp.eq.s32.totalorder %v168, %v282
        %vm291 = vcmp.eq.s32.totalorder %v169, %v282
        %vm292 = vcmp.eq.s32.totalorder %v168, %v285
        %vm293 = vcmp.eq.s32.totalorder %v169, %v285
        %vm294 = vmor %vm260, %vm286
        %vm295 = vmor %vm261, %vm287
        %vm296 = vmor %vm262, %vm288
        %vm297 = vmor %vm263, %vm289
        %vm298 = vmor %vm264, %vm290
        %vm299 = vmor %vm265, %vm291
        %vm300 = vmor %vm266, %vm292
        %vm301 = vmor %vm267, %vm293
        %v302 = vsel %vm294, 1, 0
        %v303 = vsel %vm295, 1, 0
        %v304 = vsel %vm296, 1, 0
        %v305 = vsel %vm297, 1, 0
        %v306 = vsel %vm298, 1, 0
        %v307 = vsel %vm299, 1, 0
        %v308 = vsel %vm300, 1, 0
        %v309 = vsel %vm301, 1, 0
        %v310 = vcvt.s32.f32 %v302
        %v311 = vcvt.s32.f32 %v303
        %v312 = vcvt.s32.f32 %v304
        %v313 = vcvt.s32.f32 %v305
        %v314 = vcvt.s32.f32 %v306
        %v315 = vcvt.s32.f32 %v307
        %v316 = vcvt.s32.f32 %v308
        %v317 = vcvt.s32.f32 %v309
        %v318 = vld [vmem:[#allocation4] sm:$0xff]
        %v319 = vld [vmem:[#allocation4 + $0x8] sm:$0xff]
        %v320 = vld [vmem:[#allocation4 + $0x10] sm:$0xff]
        %v321 = vld [vmem:[#allocation4 + $0x18] sm:$0xff]
        %v322 = vld [vmem:[#allocation4 + $0x20] sm:$0xff]
        %v323 = vld [vmem:[#allocation4 + $0x28] sm:$0xff]
        %v324 = vld [vmem:[#allocation4 + $0x30] sm:$0xff]
        %v325 = vld [vmem:[#allocation4 + $0x38] sm:$0xff]
        %v326 = vld [vmem:[#allocation4 + $0x40] sm:$0xff]
        %v327 = vld [vmem:[#allocation4 + $0x48] sm:$0xff]
        %v328 = vld [vmem:[#allocation4 + $0x50] sm:$0xff]
        %v329 = vld [vmem:[#allocation4 + $0x58] sm:$0xff]
        %v330 = vld [vmem:[#allocation4 + $0x60] sm:$0xff]
        %v331 = vld [vmem:[#allocation4 + $0x68] sm:$0xff]
        %v332 = vld [vmem:[#allocation4 + $0x70] sm:$0xff]
        %v333 = vld [vmem:[#allocation4 + $0x78] sm:$0xff]
        %v334 = vld [vmem:[#allocation4 + $0x80] sm:$0xff]
        %v335 = vld [vmem:[#allocation4 + $0x88] sm:$0xff]
        %v336 = vld [vmem:[#allocation4 + $0x90] sm:$0xff]
        %v337 = vld [vmem:[#allocation4 + $0x98] sm:$0xff]
        %v338 = vld [vmem:[#allocation4 + $0xa0] sm:$0xff]
        %v339 = vld [vmem:[#allocation4 + $0xa8] sm:$0xff]
        %v340 = vld [vmem:[#allocation4 + $0xb0] sm:$0xff]
        %v341 = vld [vmem:[#allocation4 + $0xb8] sm:$0xff]
        %v342 = vld [vmem:[#allocation4 + $0xc0] sm:$0xff]
        %v343 = vld [vmem:[#allocation4 + $0xc8] sm:$0xff]
        %v344 = vld [vmem:[#allocation4 + $0xd0] sm:$0xff]
        %v345 = vld [vmem:[#allocation4 + $0xd8] sm:$0xff]
        %v346 = vld [vmem:[#allocation4 + $0xe0] sm:$0xff]
        %v347 = vld [vmem:[#allocation4 + $0xe8] sm:$0xff]
        %v348 = vld [vmem:[#allocation4 + $0xf0] sm:$0xff]
        %v349 = vld [vmem:[#allocation4 + $0xf8] sm:$0xff]
        %350 = vmatprep.subr.mxu0 0.0
        %351 = vmatpush1.msra.mxu0 %v318
        %352 = vmatprep.subr.mxu0 0.0
        %353 = vmatpush1.msra.mxu0 %v319
        %354 = vmatprep.subr.mxu0 0.0
        %355 = vmatpush1.msra.mxu0 %v320
        %356 = vmatprep.subr.mxu0 0.0
        %357 = vmatpush1.msra.mxu0 %v321
        %358 = vmatprep.subr.mxu0 0.0
        %359 = vmatpush1.msra.mxu0 %v322
        %360 = vmatprep.subr.mxu0 0.0
        %361 = vmatpush1.msra.mxu0 %v323
        %362 = vmatprep.subr.mxu0 0.0
        %363 = vmatpush1.msra.mxu0 %v324
        %364 = vmatprep.subr.mxu0 0.0
        %365 = vmatpush1.msra.mxu0 %v325
        %366 = vmatprep.subr.mxu0 0.0
        %367 = vmatpush1.msra.mxu0 %v326
        %368 = vmatprep.subr.mxu0 0.0
        %369 = vmatpush1.msra.mxu0 %v327
        %370 = vmatprep.subr.mxu0 0.0
        %371 = vmatpush1.msra.mxu0 %v328
        %372 = vmatprep.subr.mxu0 0.0
        %373 = vmatpush1.msra.mxu0 %v329
        %374 = vmatprep.subr.mxu0 0.0
        %375 = vmatpush1.msra.mxu0 %v330
        %376 = vmatprep.subr.mxu0 0.0
        %377 = vmatpush1.msra.mxu0 %v331
        %378 = vmatprep.subr.mxu0 0.0
        %379 = vmatpush1.msra.mxu0 %v332
        %380 = vmatprep.subr.mxu0 0.0
        %381 = vmatpush1.msra.mxu0 %v333
        %382 = vmatprep.subr.mxu0 0.0
        %383 = vmatpush1.msra.mxu0 %v334
        %384 = vmatprep.subr.mxu0 0.0
        %385 = vmatpush1.msra.mxu0 %v335
        %386 = vmatprep.subr.mxu0 0.0
        %387 = vmatpush1.msra.mxu0 %v336
        %388 = vmatprep.subr.mxu0 0.0
        %389 = vmatpush1.msra.mxu0 %v337
        %390 = vmatprep.subr.mxu0 0.0
        %391 = vmatpush1.msra.mxu0 %v338
        %392 = vmatprep.subr.mxu0 0.0
        %393 = vmatpush1.msra.mxu0 %v339
        %394 = vmatprep.subr.mxu0 0.0
        %395 = vmatpush1.msra.mxu0 %v340
        %396 = vmatprep.subr.mxu0 0.0
        %397 = vmatpush1.msra.mxu0 %v341
        %398 = vmatprep.subr.mxu0 0.0
        %399 = vmatpush1.msra.mxu0 %v342
        %400 = vmatprep.subr.mxu0 0.0
        %401 = vmatpush1.msra.mxu0 %v343
        %402 = vmatprep.subr.mxu0 0.0
        %403 = vmatpush1.msra.mxu0 %v344
        %404 = vmatprep.subr.mxu0 0.0
        %405 = vmatpush1.msra.mxu0 %v345
        %406 = vmatprep.subr.mxu0 0.0
        %407 = vmatpush1.msra.mxu0 %v346
        %408 = vmatprep.subr.mxu0 0.0
        %409 = vmatpush1.msra.mxu0 %v347
        %410 = vmatprep.subr.mxu0 0.0
        %411 = vmatpush1.msra.mxu0 %v348
        %412 = vmatprep.subr.mxu0 0.0
        %413 = vmatpush1.msra.mxu0 %v349
        %414 = vmatprep.mubr.f32.mxu0 %v311
        %415 = vmatmul.mubr.f32.gmra.mrb[0].mxu0 %v310
        %v416 = vpop.f32.mrb[0].mxu0
        %v417 = vadd.f32 0.0, %v416
        %v418 = vpop.f32.mrb[0].mxu0
        %419 = vmatprep.mubr.f32.mxu0 %v313
        %420 = vmatmul.mubr.f32.gmra.mrb[0].mxu0 %v312
        %v421 = vpop.f32.mrb[0].mxu0
        %v422 = vadd.f32 0.0, %v421
        %v423 = vpop.f32.mrb[0].mxu0
        %424 = vmatprep.mubr.f32.mxu0 %v315
        %425 = vmatmul.mubr.f32.gmra.mrb[0].mxu0 %v314
        %v426 = vpop.f32.mrb[0].mxu0
        %v427 = vadd.f32 0.0, %v426
        %v428 = vpop.f32.mrb[0].mxu0
        %429 = vmatprep.mubr.f32.mxu0 %v317
        %430 = vmatmul.mubr.f32.gmra.mrb[0].mxu0 %v316
        %v431 = vpop.f32.mrb[0].mxu0
        %v432 = vadd.f32 0.0, %v431
        %v433 = vpop.f32.mrb[0].mxu0
        %434 = vdwg.mxu0
        %435 = vst [vmem:[%s159] sm:$0xff] %v417
        %436 = vst [vmem:[%s159 + $0x8] sm:$0xff] %v422
        %437 = vst [vmem:[%s159 + $0x10] sm:$0xff] %v427
        %438 = vst [vmem:[%s159 + $0x18] sm:$0xff] %v432
        %s439 = sand.u32 %s79, 1
        %s440 = scalar_lea.sflag [#allocation6], %s439
        %s441 = sand.u32 %s79, 1
        %s442 = smul.addr %s441, 32
        %s443 = scalar_lea.vmem [#allocation7], %s442
        // Predicated region
        $region33: #{tpu_custom_call.1} parent=27 // pred_check
          %p444 = pneg %p89
        $region34: #{tpu_custom_call.1} parent=27 // pred_check_branch
          %446 = sbr.rel (%p444) target = $region36
        $region35: #{tpu_custom_call.1} parent=27 // pred_region
          %s447 = smul.u32 4, %s24
          %s449 = ssub.s32 512, 512
          %450 = vsyncadd %s440, %s449
          %s451 = smul.addr %s447, 128
          %s452 = scalar_lea.hbm %s3, %s451
          %s453 = sshll.u32 %s443, 4
          %s454 = int_to_ptr.vmem [resolvable:$true] %s453
          %459 = dma.vmem_to_hbm [thread:$0]  %s454, 512, %s452, %s440, 128, 128, 8
        $region36: #{tpu_custom_call.1} parent=27 // pred_fallthru
          _
      $region28: #{tpu_custom_call.1} parent=5 // pred_fallthru
        _
      %p460 = scmp.le.s32.totalorder 2, %s19
      // Predicated region
      $region37: #{tpu_custom_call.1} parent=5 // pred_check
        %p461 = pneg %p460
      $region38: #{tpu_custom_call.1} parent=5 // pred_check_branch
        %463 = sbr.rel (%p461) target = $region40
      $region39: #{tpu_custom_call.1} parent=5 // pred_region
        %s464 = ssub.s32 %s19, 2
        // Predicated region
        $region41: #{tpu_custom_call.1} parent=39 // pred_check
          %p465 = pneg %p95
        $region42: #{tpu_custom_call.1} parent=39 // pred_check_branch
          %467 = sbr.rel (%p465) target = $region44
        $region43: #{tpu_custom_call.1} parent=39 // pred_region
          %s468 = sand.u32 %s80, 1
          %s469 = scalar_lea.sflag [#allocation6], %s468
          %s470 = sand.u32 %s80, 1
          %s471 = smul.addr %s470, 32
          %s472 = scalar_lea.vmem [#allocation7], %s471
          %473 = dma.done %s469, 512
        $region44: #{tpu_custom_call.1} parent=39 // pred_fallthru
          _
      $region40: #{tpu_custom_call.1} parent=5 // pred_fallthru
        _
    $region6: #{tpu_custom_call.1} parent=1 // loop_footer
      %s23 = sadd.s32 1, %s19
    $region7: #{tpu_custom_call.1} parent=1 // loop_footer_branch
      %18 = sbr.rel target = $region3
    $region8: #{tpu_custom_call.1} parent=1 // loop_exit
      _
    %474 = vsyncpa [#allocation5], 1
    %s475 = scalar_lea.sflag [#allocation5], 1
    %476 = vsyncpa %s475, 1
    %477 = vsyncpa [#allocation6], 1
    %s478 = scalar_lea.sflag [#allocation6], 1
    %479 = vsyncpa %s478, 1

</llo_original>
